<compile_context>
chip_gen: v7x
topology: tpu7x:2x2x1
jax: 0.10.0
libtpu: 0.0.40
codegen_flags: <defaults>
</compile_context>

<pallas_src>
import functools

import jax
import jax.numpy as jnp
from jax.experimental import pallas as pl
from jax.experimental.pallas import tpu as pltpu

_LANE = 128


def _q_relu_kernel(x_ref, o_ref, *, act_func, quantize, clip_val, scale):
    """Elementwise PACT ReLU + learned-clip linear quantization on one tile."""
    x = x_ref[...]
    if quantize:
        # Compute clamp / scale / round in f32 (bit-exact vs the f32 reference
        # even for bf16 inputs); cast back to the storage dtype on store.
        # ReLU and the quantizer's lower clamp coincide -> clamp to [0, clip].
        y = jnp.clip(x.astype(jnp.float32), 0.0, clip_val)
        y = jnp.round(y * scale) / scale          # quantize + dequantize
        o_ref[...] = y.astype(o_ref.dtype)
    elif act_func:
        o_ref[...] = jnp.maximum(x, 0)
    else:
        o_ref[...] = x


def _q_relu_jnp(x, *, act_func, quantize, clip_val, scale):
    """Same math in plain jnp, used for the <128-element ragged tail."""
    if quantize:
        y = jnp.clip(x.astype(jnp.float32), 0.0, clip_val)
        return (jnp.round(y * scale) / scale).astype(x.dtype)
    return jnp.maximum(x, 0) if act_func else x


def _block_tuning(itemsize):
    """Per-generation block budget and minimum grid length."""
    kind = ""
    try:
        kind = jax.devices()[0].device_kind.lower()
    except Exception:
        pass
    if "v5" in kind:
        budget, min_blocks = 2 << 20, 1    # v5e: 16 MiB default scoped VMEM
    elif "v6" in kind:
        budget, min_blocks = 4 << 20, 1    # v6e: 32 MiB scoped, single TC
    elif "v7" in kind:
        budget, min_blocks = 4 << 20, 4    # v7x: 2 TCs -> want >=4 grid steps
    else:
        budget, min_blocks = 2 << 20, 1    # unknown chip: conservative
    # Sublane packing multiple: f32 -> 8 rows, bf16 -> 16, int8 -> 32.
    packing = 8 * max(1, 4 // itemsize)
    max_rows = max(packing, (budget // (_LANE * itemsize)) // packing * packing)
    return max_rows, packing, min_blocks


def q_relu_forward(x, *, num_bit=32, clip_val=6.0, act_func=True):
    """Pallas-backed forward pass of Q_ReLU.

    x        : float array (any shape, e.g. NCHW)
    num_bit  : activation bit width (32 == no quantization, matches __init__)
    clip_val : PACT clip value (only used when num_bit < 32)
    """
    quantize = num_bit < 32
    if not quantize and not act_func:
        return x                              # identity config: no HBM round trip

    orig_shape = x.shape
    dtype = x.dtype
    itemsize = jnp.dtype(dtype).itemsize

    if quantize:
        clip_f = max(float(clip_val), 1e-12)  # guard degenerate alpha <= 0
        scale = float(2 ** num_bit - 1) / clip_f
    else:
        clip_f, scale = 0.0, 1.0

    kernel = functools.partial(
        _q_relu_kernel, act_func=act_func, quantize=quantize,
        clip_val=clip_f, scale=scale)
    elementwise = functools.partial(
        _q_relu_jnp, act_func=act_func, quantize=quantize,
        clip_val=clip_f, scale=scale)

    flat = x.reshape(-1)
    total = flat.shape[0]
    rows = total // _LANE                     # 128-aligned prefix -> kernel
    aligned = rows * _LANE                    # <=127-element tail -> plain jnp

    if rows == 0:
        return elementwise(x)                 # tensor smaller than one lane row

    max_rows, packing, min_blocks = _block_tuning(itemsize)

    block_rows = min(rows, max_rows)
    if min_blocks > 1 and rows > min_blocks * packing:
        block_rows = min(block_rows,
                         max(packing, (rows // min_blocks) // packing * packing))
    if block_rows < rows:                     # tiled: honor sublane packing
        block_rows = max(packing, (block_rows // packing) * packing)
    num_blocks = pl.cdiv(rows, block_rows)    # ragged last block handled by Pallas

    x2 = flat[:aligned].reshape(rows, _LANE)  # lane-dense slab

    out2 = pl.pallas_call(
        kernel,
        out_shape=jax.ShapeDtypeStruct((rows, _LANE), dtype),
        grid=(num_blocks,),
        in_specs=[pl.BlockSpec((block_rows, _LANE), lambda i: (i, 0))],
        out_specs=pl.BlockSpec((block_rows, _LANE), lambda i: (i, 0)),
        compiler_params=pltpu.CompilerParams(
            dimension_semantics=("parallel",),       # megacore-shardable on v7x
            vmem_limit_bytes=32 * 1024 * 1024,
        ),
    )(x2)

    if aligned == total:
        return out2.reshape(orig_shape)

    tail_out = elementwise(flat[aligned:])
    return jnp.concatenate([out2.reshape(-1), tail_out]).reshape(orig_shape)


def _reference(x, num_bit, clip_val, act_func=True):
    y = jnp.maximum(x, 0.0) if act_func else x
    if num_bit < 32:
        y = jnp.clip(y, 0.0, clip_val)
        scale = (2 ** num_bit - 1) / clip_val
        y = jnp.round(y * scale) / scale
    return y


if __name__ == "__main__":
    key = jax.random.PRNGKey(0)
    k0, k1, k2, k3 = jax.random.split(key, 4)

    # NCHW input, small shape: batch=2, channels=4, spatial=16x16
    x = jax.random.normal(k0, (2, 4, 16, 16), dtype=jnp.float32) * 3.0

    # 1) Default-constructed Q_ReLU(): num_bit=32 -> plain ReLU
    y_relu = jax.block_until_ready(q_relu_forward(x, num_bit=32))
    assert jnp.allclose(y_relu, _reference(x, 32, 6.0), atol=1e-6)

    # 2) After .initialize(4, 6.0, ...): ReLU + 4-bit PACT quant
    y_q4 = jax.block_until_ready(q_relu_forward(x, num_bit=4, clip_val=6.0))
    assert jnp.allclose(y_q4, _reference(x, 4, 6.0), atol=1e-5)

    # 3) act_func=False + quantization: lower clamp to 0 must still apply
    y_nq = jax.block_until_ready(
        q_relu_forward(x, num_bit=4, clip_val=6.0, act_func=False))
    assert jnp.allclose(y_nq, _reference(x, 4, 6.0, act_func=False), atol=1e-5)

    # 3b) Identity config (num_bit=32, act_func=False): passthrough, no kernel
    y_id = jax.block_until_ready(q_relu_forward(x, num_bit=32, act_func=False))
    assert jnp.array_equal(y_id, x)

    # 4) Size not a multiple of 128 -> exercises the aligned-prefix + jnp tail path
    x_odd = jax.random.normal(k1, (2, 3, 5, 7), dtype=jnp.float32) * 3.0
    y_odd = jax.block_until_ready(q_relu_forward(x_odd, num_bit=4, clip_val=6.0))
    assert jnp.allclose(y_odd, _reference(x_odd, 4, 6.0), atol=1e-5)

    # 5) Multi-block grid with a ragged (partial) last block
    x_big = jax.random.normal(k2, (4, 8, 96, 96), dtype=jnp.float32) * 3.0
    y_big = jax.block_until_ready(q_relu_forward(x_big, num_bit=4, clip_val=6.0))
    assert jnp.allclose(y_big, _reference(x_big, 4, 6.0), atol=1e-5)

    # 6) bf16 activations: quant math runs in f32 inside the kernel
    x_bf16 = (jax.random.normal(k3, (2, 4, 16, 16), dtype=jnp.float32) * 3.0
              ).astype(jnp.bfloat16)
    y_bf16 = jax.block_until_ready(q_relu_forward(x_bf16, num_bit=4, clip_val=6.0))
    ref_bf16 = _reference(x_bf16.astype(jnp.float32), 4, 6.0).astype(jnp.bfloat16)
    assert jnp.allclose(y_bf16.astype(jnp.float32),
                        ref_bf16.astype(jnp.float32), atol=2e-2)

    print("KERNEL_OK")
</pallas_src>

<mosaic_0001>
module attributes {stable_mosaic.version = 11 : i64} {
  func.func @_q_relu_kernel(%arg0: i32, %arg1: memref<16x128xf32, #tpu.memory_space<vmem>>, %arg2: memref<16x128xf32, #tpu.memory_space<vmem>>) attributes {dimension_semantics = [#tpu.dimension_semantics<parallel>], iteration_bounds = array<i64: 1>, scalar_prefetch = 0 : i64, scratch_operands = 0 : i64, tpu.core_type = #tpu.core_type<tc>, window_params = [{transform_indices = @transform_0, window_bounds = array<i64: 16, 128>}, {transform_indices = @transform_1, window_bounds = array<i64: 16, 128>}]} {
    %c0 = arith.constant 0 : index
    %c0_0 = arith.constant 0 : index
    %0 = vector.load %arg1[%c0, %c0_0] : memref<16x128xf32, #tpu.memory_space<vmem>>, vector<16x128xf32>
    %cst = arith.constant 0.000000e+00 : f32
    %1 = vector.broadcast %cst : f32 to vector<16x128xf32>
    %2 = arith.maximumf %0, %1 : vector<16x128xf32>
    %c0_1 = arith.constant 0 : index
    %c0_2 = arith.constant 0 : index
    %3 = vector.load %arg2[%c0_1, %c0_2] : memref<16x128xf32, #tpu.memory_space<vmem>>, vector<16x128xf32>
    tpu.vector_store %arg2[%c0_1, %c0_2], %2 {strides = array<i32>} : memref<16x128xf32, #tpu.memory_space<vmem>>, vector<16x128xf32>,
    return
  }
  func.func @transform_0(%arg0: i32) -> (i32, i32) {
    %c0_i32 = arith.constant 0 : i32
    %c0_i32_0 = arith.constant 0 : i32
    return %arg0, %c0_i32 : i32, i32
  }
  func.func @transform_1(%arg0: i32) -> (i32, i32) {
    %c0_i32 = arith.constant 0 : i32
    %c0_i32_0 = arith.constant 0 : i32
    return %arg0, %c0_i32 : i32, i32
  }
}

</mosaic_0001>

<llo_original>
// kernel: tpu_custom_call.1
$region0: #{tpu_custom_call.1}
  #allocation0 [shape = 'u32[]', space=smem, size = 0x4, offset = 0x4, fixed_abs, tag = 'smem constant byte address 0x4 - core index']
  #allocation1 [shape = 'u32[144,128]{1,0:T(1,128)}', space=vmem, size = 0x12000, scoped, tag = 'internal scratch']
  %s0 = inlined_call_operand.hbm [shape: f32[16,128], index: 0, kind: input, shape index: {}]
  %s1 = inlined_call_operand.hbm [shape: f32[16,128], index: 1, kind: output, shape index: {}]
  %s2 = sld [smem:[#allocation0]]
  $region18: #{tpu_custom_call.1} parent=0
    _
  %s4 = ssub.s32 1, %s2
  %s5 = scalar_select 0, %s4, %s2
  $region1: #{tpu_custom_call.1} parent=0
    #allocation2 [shape = 'u8[8192]{0}', space=vmem, size = 0x2000, scoped, tag = 'input window, operand 0, single buffered']
    #allocation3 [shape = 's32[1]{0}', space=sflag, size = 0x4, scoped, tag = 'scoped memory for tpu_custom_call.1']
    #allocation4 [shape = 's32[1]{0}', space=sflag, size = 0x4, scoped, tag = 'scoped memory for tpu_custom_call.1']
    #allocation5 [shape = 'u8[8192]{0}', space=vmem, size = 0x2000, scoped, tag = 'output window, operand 0, single buffered']
    %6 = vsyncpa [#allocation3], 0
    %7 = vsyncpa [#allocation4], 0
    // Predicated region
    $region2: #{tpu_custom_call.1} parent=1 // pred_check
      _
    $region3: #{tpu_custom_call.1} parent=1 // pred_check_branch
      %9 = sbr.rel (0) target = $region5
    $region4: #{tpu_custom_call.1} parent=1 // pred_region
      %s11 = ssub.s32 256, 256
      %12 = vsyncadd [#allocation3], %s11
      %s13 = sshll.u32 [#allocation2], 4
      %s14 = int_to_ptr.vmem [resolvable:$true] %s13
      %19 = dma.hbm_to_vmem [thread:$0]  %s0, 256, %s14, [#allocation3], 128, 128, 8
    $region5: #{tpu_custom_call.1} parent=1 // pred_fallthru
      _
    // Predicated region
    $region6: #{tpu_custom_call.1} parent=1 // pred_check
      _
    $region7: #{tpu_custom_call.1} parent=1 // pred_check_branch
      %21 = sbr.rel (0) target = $region9
    $region8: #{tpu_custom_call.1} parent=1 // pred_region
      %22 = dma.done [#allocation3], 256
    $region9: #{tpu_custom_call.1} parent=1 // pred_fallthru
      _
    %v23 = vld [vmem:[#allocation2] sm:$0xff]
    %v24 = vld [vmem:[#allocation2 + $0x8] sm:$0xff]
    %v25 = vmax.f32 %v23, 0.0
    %v26 = vmax.f32 %v24, 0.0
    %27 = vst [vmem:[#allocation5] sm:$0xff] %v25
    %28 = vst [vmem:[#allocation5 + $0x8] sm:$0xff] %v26
    // Predicated region
    $region10: #{tpu_custom_call.1} parent=1 // pred_check
      _
    $region11: #{tpu_custom_call.1} parent=1 // pred_check_branch
      %30 = sbr.rel (0) target = $region13
    $region12: #{tpu_custom_call.1} parent=1 // pred_region
      %s32 = ssub.s32 256, 256
      %33 = vsyncadd [#allocation4], %s32
      %s34 = sshll.u32 [#allocation5], 4
      %s35 = int_to_ptr.vmem [resolvable:$true] %s34
      %40 = dma.vmem_to_hbm [thread:$0]  %s35, 256, %s1, [#allocation4], 128, 128, 8
    $region13: #{tpu_custom_call.1} parent=1 // pred_fallthru
      _
    // Predicated region
    $region14: #{tpu_custom_call.1} parent=1 // pred_check
      _
    $region15: #{tpu_custom_call.1} parent=1 // pred_check_branch
      %42 = sbr.rel (0) target = $region17
    $region16: #{tpu_custom_call.1} parent=1 // pred_region
      %43 = dma.done [#allocation4], 256
    $region17: #{tpu_custom_call.1} parent=1 // pred_fallthru
      _
    %44 = vsyncpa [#allocation3], 1
    %45 = vsyncpa [#allocation4], 1

</llo_original>
